<compile_context>
chip_gen: v7x
topology: tpu7x:2x2x1
jax: 0.10.0
libtpu: 0.0.40
codegen_flags: <defaults>
</compile_context>

<pallas_src>
import math

import jax
import jax.numpy as jnp
from jax.experimental import pallas as pl
from jax.experimental.pallas import tpu as pltpu

# ---- "args" configuration ---------------------------------------------------
NAGENTS = 8
HID = 32             # hid_size
NUM_INPUTS = 16
COMM_PASSES = 2
NACTIONS = 6         # single discrete action head (naction_heads = [6])

# ---- feature-major packed-parameter slab layout (W_ROWS, W_COLS) f32 --------
HEAD_OUT = 8                                  # value(1) + nactions(6) + pad(1)
W_COLS = 2 * HID                              # 64 (fan-in of fused f|C block)
R_ENC_W = 0                                   # (HID, NUM_INPUTS)   cols [0:16)
R_FC_W = R_ENC_W + HID                        # COMM_PASSES x (HID, 2*HID)
R_HEAD_W = R_FC_W + COMM_PASSES * HID         # (HEAD_OUT, HID)     cols [0:32)
R_BIAS = R_HEAD_W + HEAD_OUT                  # (HID, 2+COMM_PASSES) bias cols
W_ROWS = R_BIAS + HID                         # 136 for the config above

OUT_ROWS = HID + HEAD_OUT                     # 40: [h(32) | value | logp(6) | pad]

# rows (= B*NAGENTS) sit on the lane axis; cap the per-step lane tile
TILE_CAP = 1024


# ---- Pallas kernel (feature-major: everything is (features, rows)) ----------
def gcommnet_kernel(x_ref, m2_ref, wb_ref, out_ref):
    tile = x_ref.shape[1]

    # encoder + tanh  (forward_state_encoder, non-recurrent branch)
    enc_w = wb_ref[R_ENC_W:R_ENC_W + HID, :NUM_INPUTS]          # (HID, NUM_INPUTS)
    enc_b = wb_ref[R_BIAS:R_BIAS + HID, 0:1]                    # (HID, 1)
    x = jnp.tanh(
        jnp.dot(enc_w, x_ref[...], preferred_element_type=jnp.float32) + enc_b
    )                                                           # (HID, tile)
    h = x

    # mask^2 row broadcast once (hoisted out of the comm loop)
    mask2 = jnp.broadcast_to(m2_ref[...], (HID, tile))          # (HID, tile)

    for i in range(COMM_PASSES):                 # static unroll (comm_passes small)
        # comm = (h * mask) * mask  == h * mask^2
        comm = h * mask2
        # TODO(synk): get_adj_matrix (hard_attn1 MLP + F.gumbel_softmax(hard=True))
        # is evaluated in the reference but its output `adj` is only consumed when
        # gnn_type == 'gat'; it is stochastic and does not affect any output here,
        # so it is omitted.
        hc = jnp.concatenate([h, comm], axis=0)                 # (2*HID, tile) sublane concat
        fc_w = wb_ref[R_FC_W + i * HID: R_FC_W + (i + 1) * HID, :]   # (HID, 2*HID)
        fc_b = wb_ref[R_BIAS:R_BIAS + HID, 1 + i:2 + i]              # (HID, 1)
        # sum([x, f_modules[i](h), C_modules[i](comm)]) -> tanh, one fused matmul
        h = jnp.tanh(
            x + jnp.dot(fc_w, hc, preferred_element_type=jnp.float32) + fc_b
        )

    # fused value + action head: row 0 = value, rows 1..6 = logits, row 7 = pad(0)
    head_w = wb_ref[R_HEAD_W:R_HEAD_W + HEAD_OUT, :HID]         # (8, HID)
    head_b = wb_ref[R_BIAS:R_BIAS + HEAD_OUT, 1 + COMM_PASSES:2 + COMM_PASSES]
    ho = jnp.dot(head_w, h, preferred_element_type=jnp.float32) + head_b  # (8, tile)

    logits = ho[1:1 + NACTIONS, :]                              # (NACTIONS, tile)
    m = jnp.max(logits, axis=0, keepdims=True)
    lse = m + jnp.log(jnp.sum(jnp.exp(logits - m), axis=0, keepdims=True))

    # subtract lse only on the logits rows: value row and pad row stay untouched
    ridx = jax.lax.broadcasted_iota(jnp.int32, (HEAD_OUT, 1), 0)
    rowmask = ((ridx >= 1) & (ridx <= NACTIONS)).astype(jnp.float32)

    out_ref[0:HID, :] = h                                       # aligned sublane slice
    out_ref[HID:HID + HEAD_OUT, :] = ho - lse * rowmask         # aligned sublane slice


# ---- parameter init (deterministic, PyTorch-Linear-style uniform) -----------
def linear_init(key, fan_in, fan_out):
    kw, kb = jax.random.split(key)
    bound = 1.0 / math.sqrt(fan_in)
    # stored as W^T: (fan_in, fan_out)  (reference-friendly layout)
    w = jax.random.uniform(kw, (fan_in, fan_out), jnp.float32, -bound, bound)
    b = jax.random.uniform(kb, (1, fan_out), jnp.float32, -bound, bound)
    return w, b


def init_params(key):
    keys = jax.random.split(key, 4 + 2 * COMM_PASSES)
    enc_w, enc_b = linear_init(keys[0], NUM_INPUTS, HID)
    f_ws, f_bs, c_ws, c_bs = [], [], [], []
    for i in range(COMM_PASSES):
        fw, fb = linear_init(keys[1 + i], HID, HID)
        cw, cb = linear_init(keys[1 + COMM_PASSES + i], HID, HID)
        f_ws.append(fw); f_bs.append(fb); c_ws.append(cw); c_bs.append(cb)
    v_w, v_b = linear_init(keys[1 + 2 * COMM_PASSES], HID, 1)
    h_w, h_b = linear_init(keys[2 + 2 * COMM_PASSES], HID, NACTIONS)
    return dict(
        enc_w=enc_w, enc_b=enc_b,
        f_w=jnp.stack(f_ws), f_b=jnp.stack(f_bs),       # (P, HID, HID), (P, 1, HID)
        c_w=jnp.stack(c_ws), c_b=jnp.stack(c_bs),
        v_w=v_w, v_b=v_b, h_w=h_w, h_b=h_b,
    )


def pack_params(p):
    """Pack all weights (transposed, (out,in)) + biases into one (W_ROWS, W_COLS) slab."""
    wb = jnp.zeros((W_ROWS, W_COLS), jnp.float32)
    wb = wb.at[R_ENC_W:R_ENC_W + HID, :NUM_INPUTS].set(p["enc_w"].T)
    for i in range(COMM_PASSES):
        fc_w = jnp.concatenate([p["f_w"][i].T, p["c_w"][i].T], axis=1)   # (HID, 2*HID)
        wb = wb.at[R_FC_W + i * HID: R_FC_W + (i + 1) * HID, :].set(fc_w)
    head_w = jnp.concatenate([p["v_w"].T, p["h_w"].T], axis=0)           # (1+NACTIONS, HID)
    wb = wb.at[R_HEAD_W:R_HEAD_W + 1 + NACTIONS, :HID].set(head_w)
    # bias columns: col0 = enc_b, col 1+i = f_b[i]+c_b[i], col 1+P = [v_b|h_b]
    wb = wb.at[R_BIAS:R_BIAS + HID, 0].set(p["enc_b"][0])
    for i in range(COMM_PASSES):
        wb = wb.at[R_BIAS:R_BIAS + HID, 1 + i].set(p["f_b"][i][0] + p["c_b"][i][0])
    head_b = jnp.concatenate([p["v_b"][0], p["h_b"][0]])                 # (1+NACTIONS,)
    wb = wb.at[R_BIAS:R_BIAS + 1 + NACTIONS, 1 + COMM_PASSES].set(head_b)
    return wb


def _round_up(x, m):
    return (x + m - 1) // m * m


# ---- wrapper ----------------------------------------------------------------
@jax.jit
def gcommnet_forward(x, agent_mask, wb):
    """x: (B, N, NUM_INPUTS), agent_mask: (B, N, 1), wb: packed params."""
    B, N, _ = x.shape
    rows = B * N

    # Tile selection (rows live on the lane axis):
    #   rows <= TILE_CAP -> one grid step (no per-step overhead on v5e/v6e);
    #   larger batches   -> TILE_CAP-lane "parallel" steps (both TCs on v7x).
    if rows <= TILE_CAP:
        rows_p = _round_up(rows, 128)
        tile = rows_p
    else:
        tile = TILE_CAP
        rows_p = _round_up(rows, TILE_CAP)

    # feature-major inputs: x^T (features, rows) and mask^2 as a single row
    xT = x.reshape(rows, NUM_INPUTS).T                        # (NUM_INPUTS, rows)
    m2 = (agent_mask * agent_mask).reshape(1, rows)           # (1, rows)
    if rows_p != rows:
        xT = jnp.pad(xT, ((0, 0), (0, rows_p - rows)))
        m2 = jnp.pad(m2, ((0, 0), (0, rows_p - rows)))

    out = pl.pallas_call(
        gcommnet_kernel,
        out_shape=jax.ShapeDtypeStruct((OUT_ROWS, rows_p), jnp.float32),
        grid=(rows_p // tile,),
        in_specs=[
            pl.BlockSpec((NUM_INPUTS, tile), lambda i: (0, i)),
            pl.BlockSpec((1, tile), lambda i: (0, i)),
            # constant index_map -> weights resident across grid steps (no re-DMA)
            pl.BlockSpec((W_ROWS, W_COLS), lambda i: (0, 0)),
        ],
        out_specs=pl.BlockSpec((OUT_ROWS, tile), lambda i: (0, i)),
        compiler_params=pltpu.CompilerParams(
            dimension_semantics=("parallel",)),
    )(xT, m2, wb)

    h = out[0:HID, :rows].T.reshape(B, N, HID)
    value = out[HID, :rows].reshape(B, N, 1)
    logp = out[HID + 1:HID + 1 + NACTIONS, :rows].T.reshape(B, N, NACTIONS)
    return [logp], value, h


# ---- pure-JAX reference (for correctness check) ------------------------------
def reference(x, agent_mask, p):
    B, N, _ = x.shape
    xr = x.reshape(B * N, NUM_INPUTS)
    m = agent_mask.reshape(B * N, 1)
    xe = jnp.tanh(xr @ p["enc_w"] + p["enc_b"])
    h = xe
    for i in range(COMM_PASSES):
        comm = h * m
        comm = comm * m
        c = comm @ p["c_w"][i] + p["c_b"][i]
        h = jnp.tanh(xe + (h @ p["f_w"][i] + p["f_b"][i]) + c)
    value = h @ p["v_w"] + p["v_b"]
    logits = h @ p["h_w"] + p["h_b"]
    logp = jax.nn.log_softmax(logits, axis=-1)
    return (logp.reshape(B, N, NACTIONS),
            value.reshape(B, N, 1),
            h.reshape(B, N, HID))


if __name__ == "__main__":
    key = jax.random.PRNGKey(0)
    k_param, k_x, k_m = jax.random.split(key, 3)
    params = init_params(k_param)
    wb = pack_params(params)

    B = 16                                     # batch of independent episodes
    x = jax.random.normal(k_x, (B, NAGENTS, NUM_INPUTS), dtype=jnp.float32)
    # per-episode 'alive_mask' (get_agent_mask); default path would be all-ones
    agent_mask = (jax.random.uniform(k_m, (B, NAGENTS, 1)) > 0.2).astype(jnp.float32)

    action, value, h = gcommnet_forward(x, agent_mask, wb)
    jax.block_until_ready((action, value, h))

    logp_ref, value_ref, h_ref = reference(x, agent_mask, params)
    assert jnp.allclose(action[0], logp_ref, atol=1e-5, rtol=1e-5)
    assert jnp.allclose(value, value_ref, atol=1e-5, rtol=1e-5)
    assert jnp.allclose(h, h_ref, atol=1e-5, rtol=1e-5)

    print("KERNEL_OK")
</pallas_src>

<mosaic_0001>
module attributes {stable_mosaic.version = 11 : i64} {
  func.func @gcommnet_kernel(%arg0: i32, %arg1: memref<16x128xf32, #tpu.memory_space<vmem>>, %arg2: memref<1x128xf32, #tpu.memory_space<vmem>>, %arg3: memref<136x64xf32, #tpu.memory_space<vmem>>, %arg4: memref<40x128xf32, #tpu.memory_space<vmem>>) attributes {dimension_semantics = [#tpu.dimension_semantics<parallel>], iteration_bounds = array<i64: 1>, scalar_prefetch = 0 : i64, scratch_operands = 0 : i64, tpu.core_type = #tpu.core_type<tc>, window_params = [{transform_indices = @transform_0, window_bounds = array<i64: 16, 128>}, {transform_indices = @transform_1, window_bounds = array<i64: 1, 128>}, {pipeline_mode = #tpu.pipeline_mode<synchronous>, transform_indices = @transform_2, window_bounds = array<i64: 136, 64>}, {transform_indices = @transform_3, window_bounds = array<i64: 40, 128>}]} {
    %c0 = arith.constant 0 : index
    %c0_0 = arith.constant 0 : index
    %0 = vector.load %arg3[%c0, %c0_0] : memref<136x64xf32, #tpu.memory_space<vmem>>, vector<32x16xf32>
    %c104 = arith.constant 104 : index
    %c0_1 = arith.constant 0 : index
    %1 = vector.load %arg3[%c104, %c0_1] : memref<136x64xf32, #tpu.memory_space<vmem>>, vector<32x1xf32>
    %c0_2 = arith.constant 0 : index
    %c0_3 = arith.constant 0 : index
    %2 = vector.load %arg1[%c0_2, %c0_3] : memref<16x128xf32, #tpu.memory_space<vmem>>, vector<16x128xf32>
    %cst = arith.constant dense<0.000000e+00> : vector<32x128xf32>
    %3 = tpu.matmul %0, %2, %cst {dimension_numbers = #tpu.dot_dimension_numbers<[1], [0], [0], [1], [0, 0, 1, 1], [], []>} : vector<32x16xf32>, vector<16x128xf32>, vector<32x128xf32> -> vector<32x128xf32>
    %4 = vector.broadcast %1 : vector<32x1xf32> to vector<32x128xf32>
    %5 = arith.addf %3, %4 : vector<32x128xf32>
    %6 = math.tanh %5 : vector<32x128xf32>
    %c0_4 = arith.constant 0 : index
    %c0_5 = arith.constant 0 : index
    %7 = vector.load %arg2[%c0_4, %c0_5] : memref<1x128xf32, #tpu.memory_space<vmem>>, vector<1x128xf32>
    %8 = vector.shape_cast %7 : vector<1x128xf32> to vector<1x128xf32>
    %9 = vector.broadcast %8 : vector<1x128xf32> to vector<32x128xf32>
    %10 = arith.mulf %6, %9 : vector<32x128xf32>
    %11 = tpu.concatenate %6, %10 in 0 : vector<32x128xf32>, vector<32x128xf32> -> vector<64x128xf32>
    %c32 = arith.constant 32 : index
    %c0_6 = arith.constant 0 : index
    %12 = vector.load %arg3[%c32, %c0_6] : memref<136x64xf32, #tpu.memory_space<vmem>>, vector<32x64xf32>
    %c104_7 = arith.constant 104 : index
    %c1 = arith.constant 1 : index
    %13 = vector.load %arg3[%c104_7, %c1] : memref<136x64xf32, #tpu.memory_space<vmem>>, vector<32x1xf32>
    %cst_8 = arith.constant dense<0.000000e+00> : vector<32x128xf32>
    %14 = tpu.matmul %12, %11, %cst_8 {dimension_numbers = #tpu.dot_dimension_numbers<[1], [0], [0], [1], [0, 0, 1, 1], [], []>} : vector<32x64xf32>, vector<64x128xf32>, vector<32x128xf32> -> vector<32x128xf32>
    %15 = arith.addf %6, %14 : vector<32x128xf32>
    %16 = vector.broadcast %13 : vector<32x1xf32> to vector<32x128xf32>
    %17 = arith.addf %15, %16 : vector<32x128xf32>
    %18 = math.tanh %17 : vector<32x128xf32>
    %19 = arith.mulf %18, %9 : vector<32x128xf32>
    %20 = tpu.concatenate %18, %19 in 0 : vector<32x128xf32>, vector<32x128xf32> -> vector<64x128xf32>
    %c64 = arith.constant 64 : index
    %c0_9 = arith.constant 0 : index
    %21 = vector.load %arg3[%c64, %c0_9] : memref<136x64xf32, #tpu.memory_space<vmem>>, vector<32x64xf32>
    %c104_10 = arith.constant 104 : index
    %c2 = arith.constant 2 : index
    %22 = vector.load %arg3[%c104_10, %c2] : memref<136x64xf32, #tpu.memory_space<vmem>>, vector<32x1xf32>
    %cst_11 = arith.constant dense<0.000000e+00> : vector<32x128xf32>
    %23 = tpu.matmul %21, %20, %cst_11 {dimension_numbers = #tpu.dot_dimension_numbers<[1], [0], [0], [1], [0, 0, 1, 1], [], []>} : vector<32x64xf32>, vector<64x128xf32>, vector<32x128xf32> -> vector<32x128xf32>
    %24 = arith.addf %6, %23 : vector<32x128xf32>
    %25 = vector.broadcast %22 : vector<32x1xf32> to vector<32x128xf32>
    %26 = arith.addf %24, %25 : vector<32x128xf32>
    %27 = math.tanh %26 : vector<32x128xf32>
    %c96 = arith.constant 96 : index
    %c0_12 = arith.constant 0 : index
    %28 = vector.load %arg3[%c96, %c0_12] : memref<136x64xf32, #tpu.memory_space<vmem>>, vector<8x32xf32>
    %c104_13 = arith.constant 104 : index
    %c3 = arith.constant 3 : index
    %29 = vector.load %arg3[%c104_13, %c3] : memref<136x64xf32, #tpu.memory_space<vmem>>, vector<8x1xf32>
    %cst_14 = arith.constant dense<0.000000e+00> : vector<8x128xf32>
    %30 = tpu.matmul %28, %27, %cst_14 {dimension_numbers = #tpu.dot_dimension_numbers<[1], [0], [0], [1], [0, 0, 1, 1], [], []>} : vector<8x32xf32>, vector<32x128xf32>, vector<8x128xf32> -> vector<8x128xf32>
    %31 = vector.broadcast %29 : vector<8x1xf32> to vector<8x128xf32>
    %32 = arith.addf %30, %31 : vector<8x128xf32>
    %33 = vector.extract_strided_slice %32 {offsets = [1, 0], sizes = [6, 128], strides = [1, 1]} : vector<8x128xf32> to vector<6x128xf32>
    %cst_15 = arith.constant dense<0xFF800000> : vector<128xf32>
    %34 = vector.multi_reduction <maximumf>, %33, %cst_15 [0] : vector<6x128xf32> to vector<128xf32>
    %35 = vector.shape_cast %34 : vector<128xf32> to vector<1x128xf32>
    %36 = vector.broadcast %35 : vector<1x128xf32> to vector<6x128xf32>
    %37 = arith.subf %33, %36 : vector<6x128xf32>
    %38 = math.exp %37 : vector<6x128xf32>
    %cst_16 = arith.constant dense<0.000000e+00> : vector<128xf32>
    %39 = vector.multi_reduction <add>, %38, %cst_16 [0] : vector<6x128xf32> to vector<128xf32>
    %40 = vector.shape_cast %39 : vector<128xf32> to vector<1x128xf32>
    %41 = math.log %40 : vector<1x128xf32>
    %42 = arith.addf %35, %41 : vector<1x128xf32>
    %43 = tpu.iota {dimensions = array<i32: 0>} : vector<8x1xi32>
    %c1_i32 = arith.constant 1 : i32
    %44 = vector.broadcast %c1_i32 : i32 to vector<8x1xi32>
    %45 = arith.cmpi sge, %43, %44 : vector<8x1xi32>
    %c6_i32 = arith.constant 6 : i32
    %46 = vector.broadcast %c6_i32 : i32 to vector<8x1xi32>
    %47 = arith.cmpi sle, %43, %46 : vector<8x1xi32>
    %48 = arith.andi %45, %47 : vector<8x1xi1>
    %49 = arith.extui %48 : vector<8x1xi1> to vector<8x1xi32>
    %50 = arith.sitofp %49 : vector<8x1xi32> to vector<8x1xf32>
    %c0_17 = arith.constant 0 : index
    %c0_18 = arith.constant 0 : index
    %51 = vector.load %arg4[%c0_17, %c0_18] : memref<40x128xf32, #tpu.memory_space<vmem>>, vector<32x128xf32>
    tpu.vector_store %arg4[%c0_17, %c0_18], %27 {strides = array<i32>} : memref<40x128xf32, #tpu.memory_space<vmem>>, vector<32x128xf32>,
    %52 = vector.broadcast %42 : vector<1x128xf32> to vector<8x128xf32>
    %53 = vector.broadcast %50 : vector<8x1xf32> to vector<8x128xf32>
    %54 = arith.mulf %52, %53 : vector<8x128xf32>
    %55 = arith.subf %32, %54 : vector<8x128xf32>
    %c32_19 = arith.constant 32 : index
    %c0_20 = arith.constant 0 : index
    %56 = vector.load %arg4[%c32_19, %c0_20] : memref<40x128xf32, #tpu.memory_space<vmem>>, vector<8x128xf32>
    tpu.vector_store %arg4[%c32_19, %c0_20], %55 {strides = array<i32>} : memref<40x128xf32, #tpu.memory_space<vmem>>, vector<8x128xf32>,
    return
  }
  func.func @transform_0(%arg0: i32) -> (i32, i32) {
    %c0_i32 = arith.constant 0 : i32
    %c0_i32_0 = arith.constant 0 : i32
    return %c0_i32, %arg0 : i32, i32
  }
  func.func @transform_1(%arg0: i32) -> (i32, i32) {
    %c0_i32 = arith.constant 0 : i32
    %c0_i32_0 = arith.constant 0 : i32
    return %c0_i32, %arg0 : i32, i32
  }
  func.func @transform_2(%arg0: i32) -> (i32, i32) {
    %c0_i32 = arith.constant 0 : i32
    %c0_i32_0 = arith.constant 0 : i32
    %c0_i32_1 = arith.constant 0 : i32
    return %c0_i32, %c0_i32_0 : i32, i32
  }
  func.func @transform_3(%arg0: i32) -> (i32, i32) {
    %c0_i32 = arith.constant 0 : i32
    %c0_i32_0 = arith.constant 0 : i32
    return %c0_i32, %arg0 : i32, i32
  }
}

</mosaic_0001>

<llo_original>
// kernel: mul.1
$region0: #{mul.1}
  #allocation4 [shape = 's32[1]{0}', space=sflag, size = 0x4, scoped, tag = 'scoped memory for mul.1']
  %s0 = inlined_call_operand.hbm [shape: f32[16,8,1], index: 0, kind: input, shape index: {}, may-alias: {0,1}]
  %s1 = inlined_call_operand.hbm [shape: f32[16,8,1], index: 1, kind: input, shape index: {}, may-alias: {0,1}]
  %s2 = inlined_call_operand.vmem [shape: f32[16,8,1], index: 2, kind: output, shape index: {}]
  $region1: #{mul.1} parent=0
    #allocation0 [shape = 'u8[4096]{0}', space=vmem, size = 0x1000, scoped, tag = 'operand span for operand 0, may alias with: [0, 1]']
    #allocation1 [shape = 's32[1]{0}', space=sflag, size = 0x4, scoped, tag = 'scoped memory for mul.1']
    #allocation2 [shape = 'u8[4096]{0}', space=vmem, size = 0x1000, scoped, tag = 'operand span for operand 1, may alias with: [0, 1]']
    #allocation3 [shape = 's32[1]{0}', space=sflag, size = 0x4, scoped, tag = 'scoped memory for mul.1']
    %3 = vsyncpa [#allocation1], 0
    %4 = vsyncpa [#allocation3], 0
    %s6 = ssub.s32 128, 128
    %7 = vsyncadd [#allocation1], %s6
    %s8 = sshll.u32 [#allocation0], 4
    %s9 = int_to_ptr.vmem [resolvable:$true] %s8
    %14 = dma.hbm_to_vmem [thread:$0]  %s0, 128, %s9, [#allocation1], 16, 16, 1
    %s16 = ssub.s32 128, 128
    %17 = vsyncadd [#allocation3], %s16
    %s18 = sshll.u32 [#allocation2], 4
    %s19 = int_to_ptr.vmem [resolvable:$true] %s18
    %24 = dma.hbm_to_vmem [thread:$0]  %s1, 128, %s19, [#allocation3], 16, 16, 1
    %25 = dma.done [#allocation1], 128
    %26 = dma.done [#allocation3], 128
    %v27 = vld [vmem:[#allocation0] sm:$0x1]
    %v28 = vld [vmem:[#allocation2] sm:$0x1]
    %29 = xla_tuple %v27, %v28
    %30 = xla_tuple %29
    %v31 = vmul.f32 %v27, %v28
    %32 = xla_tuple %v31
    %33 = vst [vmem:[%s2] sm:$0x1] %v31
    %s34 = scalar_lea.vmem [#allocation0], 1
    %v35 = vld [vmem:[%s34] sm:$0x1]
    %s36 = scalar_lea.vmem [#allocation2], 1
    %v37 = vld [vmem:[%s36] sm:$0x1]
    %38 = xla_tuple %v35, %v37
    %39 = xla_tuple %38
    %v40 = vmul.f32 %v35, %v37
    %41 = xla_tuple %v40
    %s42 = scalar_lea.vmem %s2, 1
    %43 = vst [vmem:[%s42] sm:$0x1] %v40
    %s44 = scalar_lea.vmem [#allocation0], 2
    %v45 = vld [vmem:[%s44] sm:$0x1]
    %s46 = scalar_lea.vmem [#allocation2], 2
    %v47 = vld [vmem:[%s46] sm:$0x1]
    %48 = xla_tuple %v45, %v47
    %49 = xla_tuple %48
    %v50 = vmul.f32 %v45, %v47
    %51 = xla_tuple %v50
    %s52 = scalar_lea.vmem %s2, 2
    %53 = vst [vmem:[%s52] sm:$0x1] %v50
    %s54 = scalar_lea.vmem [#allocation0], 3
    %v55 = vld [vmem:[%s54] sm:$0x1]
    %s56 = scalar_lea.vmem [#allocation2], 3
    %v57 = vld [vmem:[%s56] sm:$0x1]
    %58 = xla_tuple %v55, %v57
    %59 = xla_tuple %58
    %v60 = vmul.f32 %v55, %v57
    %61 = xla_tuple %v60
    %s62 = scalar_lea.vmem %s2, 3
    %63 = vst [vmem:[%s62] sm:$0x1] %v60
    %s64 = scalar_lea.vmem [#allocation0], 4
    %v65 = vld [vmem:[%s64] sm:$0x1]
    %s66 = scalar_lea.vmem [#allocation2], 4
    %v67 = vld [vmem:[%s66] sm:$0x1]
    %68 = xla_tuple %v65, %v67
    %69 = xla_tuple %68
    %v70 = vmul.f32 %v65, %v67
    %71 = xla_tuple %v70
    %s72 = scalar_lea.vmem %s2, 4
    %73 = vst [vmem:[%s72] sm:$0x1] %v70
    %s74 = scalar_lea.vmem [#allocation0], 5
    %v75 = vld [vmem:[%s74] sm:$0x1]
    %s76 = scalar_lea.vmem [#allocation2], 5
    %v77 = vld [vmem:[%s76] sm:$0x1]
    %78 = xla_tuple %v75, %v77
    %79 = xla_tuple %78
    %v80 = vmul.f32 %v75, %v77
    %81 = xla_tuple %v80
    %s82 = scalar_lea.vmem %s2, 5
    %83 = vst [vmem:[%s82] sm:$0x1] %v80
    %s84 = scalar_lea.vmem [#allocation0], 6
    %v85 = vld [vmem:[%s84] sm:$0x1]
    %s86 = scalar_lea.vmem [#allocation2], 6
    %v87 = vld [vmem:[%s86] sm:$0x1]
    %88 = xla_tuple %v85, %v87
    %89 = xla_tuple %88
    %v90 = vmul.f32 %v85, %v87
    %91 = xla_tuple %v90
    %s92 = scalar_lea.vmem %s2, 6
    %93 = vst [vmem:[%s92] sm:$0x1] %v90
    %s94 = scalar_lea.vmem [#allocation0], 7
    %v95 = vld [vmem:[%s94] sm:$0x1]
    %s96 = scalar_lea.vmem [#allocation2], 7
    %v97 = vld [vmem:[%s96] sm:$0x1]
    %98 = xla_tuple %v95, %v97
    %99 = xla_tuple %98
    %v100 = vmul.f32 %v95, %v97
    %101 = xla_tuple %v100
    %s102 = scalar_lea.vmem %s2, 7
    %103 = vst [vmem:[%s102] sm:$0x1] %v100
    %104 = vsyncpa [#allocation1], 1
    %105 = vsyncpa [#allocation3], 1

// kernel: squeeze.1
$region0: #{squeeze.1}
  %s0 = inlined_call_operand.vmem [shape: f32[128], index: 0, kind: input, shape index: {}]
  %s1 = inlined_call_operand.vmem [shape: f32[16,8,1], index: 1, kind: output, shape index: {}]
  $region1: #{squeeze.1} parent=0
    #allocation0 [shape = 'u8[4096]{0}', space=vmem, size = 0x1000, scoped, tag = 'scoped mem for input reshape']
    %s3 = sshllo.u32 0, 1
    %v4 = vld [vmem:[%s0] sm:%s3]
    %5 = vst [vmem:[#allocation0] sm:%s3] %v4
    %v6 = vld [vmem:[#allocation0] sm:$0x1]
    %vm7 = vcmask 64512
    %8 = vst.msk [vmem:[%s1] sm:$0x1] %vm7, %v6
    %v9 = vld [vmem:[#allocation0] sm:$0x1]
    %10 = vrot.lane.b32.xlu0 %v9, 120
    %v11 = vpop.permute.xlu0 %10
    %vm12 = vcmask 64512
    %s13 = scalar_lea.vmem %s1, 1
    %14 = vst.msk [vmem:[%s13] sm:$0x1] %vm12, %v11
    %v15 = vld [vmem:[#allocation0] sm:$0x1]
    %16 = vrot.lane.b32.xlu0 %v15, 112
    %v17 = vpop.permute.xlu0 %16
    %vm18 = vcmask 64512
    %s19 = scalar_lea.vmem %s1, 2
    %20 = vst.msk [vmem:[%s19] sm:$0x1] %vm18, %v17
    %v21 = vld [vmem:[#allocation0] sm:$0x1]
    %22 = vrot.lane.b32.xlu0 %v21, 104
    %v23 = vpop.permute.xlu0 %22
    %vm24 = vcmask 64512
    %s25 = scalar_lea.vmem %s1, 3
    %26 = vst.msk [vmem:[%s25] sm:$0x1] %vm24, %v23
    %v27 = vld [vmem:[#allocation0] sm:$0x1]
    %28 = vrot.lane.b32.xlu0 %v27, 96
    %v29 = vpop.permute.xlu0 %28
    %vm30 = vcmask 64512
    %s31 = scalar_lea.vmem %s1, 4
    %32 = vst.msk [vmem:[%s31] sm:$0x1] %vm30, %v29
    %v33 = vld [vmem:[#allocation0] sm:$0x1]
    %34 = vrot.lane.b32.xlu0 %v33, 88
    %v35 = vpop.permute.xlu0 %34
    %vm36 = vcmask 64512
    %s37 = scalar_lea.vmem %s1, 5
    %38 = vst.msk [vmem:[%s37] sm:$0x1] %vm36, %v35
    %v39 = vld [vmem:[#allocation0] sm:$0x1]
    %40 = vrot.lane.b32.xlu0 %v39, 80
    %v41 = vpop.permute.xlu0 %40
    %vm42 = vcmask 64512
    %s43 = scalar_lea.vmem %s1, 6
    %44 = vst.msk [vmem:[%s43] sm:$0x1] %vm42, %v41
    %v45 = vld [vmem:[#allocation0] sm:$0x1]
    %46 = vrot.lane.b32.xlu0 %v45, 72
    %v47 = vpop.permute.xlu0 %46
    %vm48 = vcmask 64512
    %s49 = scalar_lea.vmem %s1, 7
    %50 = vst.msk [vmem:[%s49] sm:$0x1] %vm48, %v47
    %v51 = vld [vmem:[#allocation0] sm:$0x1]
    %52 = vrot.lane.b32.xlu0 %v51, 64
    %v53 = vpop.permute.xlu0 %52
    %vm54 = vcmask 64512
    %s55 = scalar_lea.vmem %s1, 8
    %56 = vst.msk [vmem:[%s55] sm:$0x1] %vm54, %v53
    %v57 = vld [vmem:[#allocation0] sm:$0x1]
    %58 = vrot.lane.b32.xlu0 %v57, 56
    %v59 = vpop.permute.xlu0 %58
    %vm60 = vcmask 64512
    %s61 = scalar_lea.vmem %s1, 9
    %62 = vst.msk [vmem:[%s61] sm:$0x1] %vm60, %v59
    %v63 = vld [vmem:[#allocation0] sm:$0x1]
    %64 = vrot.lane.b32.xlu0 %v63, 48
    %v65 = vpop.permute.xlu0 %64
    %vm66 = vcmask 64512
    %s67 = scalar_lea.vmem %s1, 10
    %68 = vst.msk [vmem:[%s67] sm:$0x1] %vm66, %v65
    %v69 = vld [vmem:[#allocation0] sm:$0x1]
    %70 = vrot.lane.b32.xlu0 %v69, 40
    %v71 = vpop.permute.xlu0 %70
    %vm72 = vcmask 64512
    %s73 = scalar_lea.vmem %s1, 11
    %74 = vst.msk [vmem:[%s73] sm:$0x1] %vm72, %v71
    %v75 = vld [vmem:[#allocation0] sm:$0x1]
    %76 = vrot.lane.b32.xlu0 %v75, 32
    %v77 = vpop.permute.xlu0 %76
    %vm78 = vcmask 64512
    %s79 = scalar_lea.vmem %s1, 12
    %80 = vst.msk [vmem:[%s79] sm:$0x1] %vm78, %v77
    %v81 = vld [vmem:[#allocation0] sm:$0x1]
    %82 = vrot.lane.b32.xlu0 %v81, 24
    %v83 = vpop.permute.xlu0 %82
    %vm84 = vcmask 64512
    %s85 = scalar_lea.vmem %s1, 13
    %86 = vst.msk [vmem:[%s85] sm:$0x1] %vm84, %v83
    %v87 = vld [vmem:[#allocation0] sm:$0x1]
    %88 = vrot.lane.b32.xlu0 %v87, 16
    %v89 = vpop.permute.xlu0 %88
    %vm90 = vcmask 64512
    %s91 = scalar_lea.vmem %s1, 14
    %92 = vst.msk [vmem:[%s91] sm:$0x1] %vm90, %v89
    %v93 = vld [vmem:[#allocation0] sm:$0x1]
    %94 = vrot.lane.b32.xlu0 %v93, 8
    %v95 = vpop.permute.xlu0 %94
    %vm96 = vcmask 64512
    %s97 = scalar_lea.vmem %s1, 15
    %98 = vst.msk [vmem:[%s97] sm:$0x1] %vm96, %v95

// kernel: gcommnet_forward.1
$region0: #{gcommnet_forward.1}
  #allocation0 [shape = 'u32[]', space=smem, size = 0x4, offset = 0x4, fixed_abs, tag = 'smem constant byte address 0x4 - core index']
  #allocation1 [shape = 'u32[144,128]{1,0:T(1,128)}', space=vmem, size = 0x12000, scoped, tag = 'internal scratch']
  %s0 = inlined_call_operand.vmem [shape: f32[16,128], index: 0, kind: input, shape index: {}]
  %s1 = inlined_call_operand.vmem [shape: f32[1,128], index: 1, kind: input, shape index: {}]
  %s2 = inlined_call_operand.vmem [shape: f32[136,64], index: 2, kind: input, shape index: {}]
  %s3 = inlined_call_operand.vmem [shape: f32[40,128], index: 3, kind: output, shape index: {}]
  %s4 = sld [smem:[#allocation0]]
  $region22: #{gcommnet_forward.1} parent=0
    _
  %s6 = ssub.s32 1, %s4
  %s7 = scalar_select 0, %s6, %s4
  // Predicated region
  $region2: #{gcommnet_forward.1} parent=0 // pred_check
    _
  $region3: #{gcommnet_forward.1} parent=0 // pred_check_branch
    %9 = sbr.rel (0) target = $region5
  $region4: #{gcommnet_forward.1} parent=0 // pred_region
    _
  $region5: #{gcommnet_forward.1} parent=0 // pred_fallthru
    _
  // Predicated region
  $region6: #{gcommnet_forward.1} parent=0 // pred_check
    _
  $region7: #{gcommnet_forward.1} parent=0 // pred_check_branch
    %11 = sbr.rel (0) target = $region9
  $region8: #{gcommnet_forward.1} parent=0 // pred_region
    _
  $region9: #{gcommnet_forward.1} parent=0 // pred_fallthru
    _
  // Predicated region
  $region10: #{gcommnet_forward.1} parent=0 // pred_check
    _
  $region11: #{gcommnet_forward.1} parent=0 // pred_check_branch
    %13 = sbr.rel (0) target = $region13
  $region12: #{gcommnet_forward.1} parent=0 // pred_region
    _
  $region13: #{gcommnet_forward.1} parent=0 // pred_fallthru
    _
  %v14 = vld [vmem:[%s2] sm:$0xff]
  %v15 = vld [vmem:[%s2 + $0x8] sm:$0xff]
  %v16 = vld [vmem:[%s2 + $0x10] sm:$0xff]
  %v17 = vld [vmem:[%s2 + $0x18] sm:$0xff]
  %v18 = vld [vmem:[%s2 + $0x68] sm:$0xff]
  %v19 = vld [vmem:[%s2 + $0x70] sm:$0xff]
  %v20 = vld [vmem:[%s2 + $0x78] sm:$0xff]
  %v21 = vld [vmem:[%s2 + $0x80] sm:$0xff]
  %v22 = vld [vmem:[%s0] sm:$0xff]
  %v23 = vld [vmem:[%s0 + $0x8] sm:$0xff]
  %25 = vset.pattern.permute.xlu0 0
  %26 = vperm.xlu0 %25, %v18
  %v27 = vpop.permute.xlu0 %26
  %30 = vset.pattern.permute.xlu0 0
  %31 = vperm.xlu0 %30, %v19
  %v32 = vpop.permute.xlu0 %31
  %35 = vset.pattern.permute.xlu0 0
  %36 = vperm.xlu0 %35, %v20
  %v37 = vpop.permute.xlu0 %36
  %40 = vset.pattern.permute.xlu0 0
  %41 = vperm.xlu0 %40, %v21
  %v42 = vpop.permute.xlu0 %41
  %vm44 = vcmask 130048
  %v46 = vsel %vm44, %v14, 0
  %v49 = vsel %vm44, %v15, 0
  %v52 = vsel %vm44, %v16, 0
  %v55 = vsel %vm44, %v17, 0
  %57 = vmatprep.subr.mxu0 0.0
  %58 = vmatpush1.msra.mxu0 %v22
  %59 = vmatprep.subr.mxu0 0.0
  %60 = vmatpush1.msra.mxu0 %v23
  %61 = vmatprep.subr.mxu0 0.0
  %62 = vmatpush1.msra.mxu0 0.0
  %63 = vmatprep.subr.mxu0 0.0
  %64 = vmatpush1.msra.mxu0 0.0
  %65 = vmatprep.subr.mxu0 0.0
  %66 = vmatpush1.msra.mxu0 0.0
  %67 = vmatprep.subr.mxu0 0.0
  %68 = vmatpush1.msra.mxu0 0.0
  %69 = vmatprep.subr.mxu0 0.0
  %70 = vmatpush1.msra.mxu0 0.0
  %71 = vmatprep.subr.mxu0 0.0
  %72 = vmatpush1.msra.mxu0 0.0
  %73 = vmatprep.subr.mxu0 0.0
  %74 = vmatpush1.msra.mxu0 0.0
  %75 = vmatprep.subr.mxu0 0.0
  %76 = vmatpush1.msra.mxu0 0.0
  %77 = vmatprep.subr.mxu0 0.0
  %78 = vmatpush1.msra.mxu0 0.0
  %79 = vmatprep.subr.mxu0 0.0
  %80 = vmatpush1.msra.mxu0 0.0
  %81 = vmatprep.subr.mxu0 0.0
  %82 = vmatpush1.msra.mxu0 0.0
  %83 = vmatprep.subr.mxu0 0.0
  %84 = vmatpush1.msra.mxu0 0.0
  %85 = vmatprep.subr.mxu0 0.0
  %86 = vmatpush1.msra.mxu0 0.0
  %87 = vmatprep.subr.mxu0 0.0
  %88 = vmatpush1.msra.mxu0 0.0
  %89 = vmatprep.subr.mxu0 0.0
  %90 = vmatpush1.msra.mxu0 0.0
  %91 = vmatprep.subr.mxu0 0.0
  %92 = vmatpush1.msra.mxu0 0.0
  %93 = vmatprep.subr.mxu0 0.0
  %94 = vmatpush1.msra.mxu0 0.0
  %95 = vmatprep.subr.mxu0 0.0
  %96 = vmatpush1.msra.mxu0 0.0
  %97 = vmatprep.subr.mxu0 0.0
  %98 = vmatpush1.msra.mxu0 0.0
  %99 = vmatprep.subr.mxu0 0.0
  %100 = vmatpush1.msra.mxu0 0.0
  %101 = vmatprep.subr.mxu0 0.0
  %102 = vmatpush1.msra.mxu0 0.0
  %103 = vmatprep.subr.mxu0 0.0
  %104 = vmatpush1.msra.mxu0 0.0
  %105 = vmatprep.subr.mxu0 0.0
  %106 = vmatpush1.msra.mxu0 0.0
  %107 = vmatprep.subr.mxu0 0.0
  %108 = vmatpush1.msra.mxu0 0.0
  %109 = vmatprep.subr.mxu0 0.0
  %110 = vmatpush1.msra.mxu0 0.0
  %111 = vmatprep.subr.mxu0 0.0
  %112 = vmatpush1.msra.mxu0 0.0
  %113 = vmatprep.subr.mxu0 0.0
  %114 = vmatpush1.msra.mxu0 0.0
  %115 = vmatprep.subr.mxu0 0.0
  %116 = vmatpush1.msra.mxu0 0.0
  %117 = vmatprep.subr.mxu0 0.0
  %118 = vmatpush1.msra.mxu0 0.0
  %119 = vmatprep.subr.mxu0 0.0
  %120 = vmatpush1.msra.mxu0 0.0
  %121 = vmatprep.mubr.f32.mxu0 0.0
  %122 = vmatmul.mubr.f32.gmra.mrb[0].mxu0 %v46
  %v123 = vpop.f32.mrb[0].mxu0
  %v124 = vadd.f32 %v27, %v123
  %v125 = vpop.f32.mrb[0].mxu0
  %126 = vmatprep.mubr.f32.mxu0 0.0
  %127 = vmatmul.mubr.f32.gmra.mrb[0].mxu0 %v49
  %v128 = vpop.f32.mrb[0].mxu0
  %v129 = vadd.f32 %v32, %v128
  %v130 = vpop.f32.mrb[0].mxu0
  %131 = vmatprep.mubr.f32.mxu0 0.0
  %132 = vmatmul.mubr.f32.gmra.mrb[0].mxu0 %v52
  %v133 = vpop.f32.mrb[0].mxu0
  %v134 = vadd.f32 %v37, %v133
  %v135 = vpop.f32.mrb[0].mxu0
  %136 = vmatprep.mubr.f32.mxu0 0.0
  %137 = vmatmul.mubr.f32.gmra.mrb[0].mxu0 %v55
  %v138 = vpop.f32.mrb[0].mxu0
  %v139 = vadd.f32 %v42, %v138
  %v140 = vpop.f32.mrb[0].mxu0
  %141 = vdwg.mxu0
  %v142 = vtanh.pop %v124
  %v143 = vtanh.pop %v129
  %v144 = vtanh.pop %v134
  %v145 = vtanh.pop %v139
  %v146 = vld [vmem:[%s1] sm:$0x1]
  %v148 = vlaneseq
  %v149 = vshrl.u32 %v148, 7
  %v150 = vsub.s32 0, %v149
  %v151 = vrot.slane %v146, %v150
  %v153 = vmul.f32 %v142, %v151
  %v154 = vmul.f32 %v143, %v151
  %v155 = vmul.f32 %v144, %v151
  %v156 = vmul.f32 %v145, %v151
  %v157 = vld [vmem:[%s2 + $0x20] sm:$0xff]
  %v158 = vld [vmem:[%s2 + $0x28] sm:$0xff]
  %v159 = vld [vmem:[%s2 + $0x30] sm:$0xff]
  %v160 = vld [vmem:[%s2 + $0x38] sm:$0xff]
  %vm161 = vcmask 523264
  %v163 = vsel %vm161, %v157, 0
  %v166 = vsel %vm161, %v158, 0
  %v169 = vsel %vm161, %v159, 0
  %v172 = vsel %vm161, %v160, 0
  %174 = vmatprep.subr.mxu0 0.0
  %175 = vmatpush1.msra.mxu0 %v142
  %176 = vmatprep.subr.mxu0 0.0
  %177 = vmatpush1.msra.mxu0 %v143
  %178 = vmatprep.subr.mxu0 0.0
  %179 = vmatpush1.msra.mxu0 %v144
  %180 = vmatprep.subr.mxu0 0.0
  %181 = vmatpush1.msra.mxu0 %v145
  %182 = vmatprep.subr.mxu0 0.0
  %183 = vmatpush1.msra.mxu0 %v153
  %184 = vmatprep.subr.mxu0 0.0
  %185 = vmatpush1.msra.mxu0 %v154
  %186 = vmatprep.subr.mxu0 0.0
  %187 = vmatpush1.msra.mxu0 %v155
  %188 = vmatprep.subr.mxu0 0.0
  %189 = vmatpush1.msra.mxu0 %v156
  %190 = vmatprep.subr.mxu0 0.0
  %191 = vmatpush1.msra.mxu0 0.0
  %192 = vmatprep.subr.mxu0 0.0
  %193 = vmatpush1.msra.mxu0 0.0
  %194 = vmatprep.subr.mxu0 0.0
  %195 = vmatpush1.msra.mxu0 0.0
  %196 = vmatprep.subr.mxu0 0.0
  %197 = vmatpush1.msra.mxu0 0.0
  %198 = vmatprep.subr.mxu0 0.0
  %199 = vmatpush1.msra.mxu0 0.0
  %200 = vmatprep.subr.mxu0 0.0
  %201 = vmatpush1.msra.mxu0 0.0
  %202 = vmatprep.subr.mxu0 0.0
  %203 = vmatpush1.msra.mxu0 0.0
  %204 = vmatprep.subr.mxu0 0.0
  %205 = vmatpush1.msra.mxu0 0.0
  %206 = vmatprep.subr.mxu0 0.0
  %207 = vmatpush1.msra.mxu0 0.0
  %208 = vmatprep.subr.mxu0 0.0
  %209 = vmatpush1.msra.mxu0 0.0
  %210 = vmatprep.subr.mxu0 0.0
  %211 = vmatpush1.msra.mxu0 0.0
  %212 = vmatprep.subr.mxu0 0.0
  %213 = vmatpush1.msra.mxu0 0.0
  %214 = vmatprep.subr.mxu0 0.0
  %215 = vmatpush1.msra.mxu0 0.0
  %216 = vmatprep.subr.mxu0 0.0
  %217 = vmatpush1.msra.mxu0 0.0
  %218 = vmatprep.subr.mxu0 0.0
  %219 = vmatpush1.msra.mxu0 0.0
  %220 = vmatprep.subr.mxu0 0.0
  %221 = vmatpush1.msra.mxu0 0.0
  %222 = vmatprep.subr.mxu0 0.0
  %223 = vmatpush1.msra.mxu0 0.0
  %224 = vmatprep.subr.mxu0 0.0
  %225 = vmatpush1.msra.mxu0 0.0
  %226 = vmatprep.subr.mxu0 0.0
  %227 = vmatpush1.msra.mxu0 0.0
  %228 = vmatprep.subr.mxu0 0.0
  %229 = vmatpush1.msra.mxu0 0.0
  %230 = vmatprep.subr.mxu0 0.0
  %231 = vmatpush1.msra.mxu0 0.0
  %232 = vmatprep.subr.mxu0 0.0
  %233 = vmatpush1.msra.mxu0 0.0
  %234 = vmatprep.subr.mxu0 0.0
  %235 = vmatpush1.msra.mxu0 0.0
  %236 = vmatprep.subr.mxu0 0.0
  %237 = vmatpush1.msra.mxu0 0.0
  %238 = vmatprep.mubr.f32.mxu0 0.0
  %239 = vmatmul.mubr.f32.gmra.mrb[0].mxu0 %v163
  %v240 = vpop.f32.mrb[0].mxu0
  %v241 = vadd.f32 0.0, %v240
  %v242 = vpop.f32.mrb[0].mxu0
  %243 = vmatprep.mubr.f32.mxu0 0.0
  %244 = vmatmul.mubr.f32.gmra.mrb[0].mxu0 %v166
  %v245 = vpop.f32.mrb[0].mxu0
  %v246 = vadd.f32 0.0, %v245
  %v247 = vpop.f32.mrb[0].mxu0
  %248 = vmatprep.mubr.f32.mxu0 0.0
  %249 = vmatmul.mubr.f32.gmra.mrb[0].mxu0 %v169
  %v250 = vpop.f32.mrb[0].mxu0
  %v251 = vadd.f32 0.0, %v250
  %v252 = vpop.f32.mrb[0].mxu0
  %253 = vmatprep.mubr.f32.mxu0 0.0
  %254 = vmatmul.mubr.f32.gmra.mrb[0].mxu0 %v172
  %v255 = vpop.f32.mrb[0].mxu0
  %v256 = vadd.f32 0.0, %v255
  %v257 = vpop.f32.mrb[0].mxu0
  %258 = vdwg.mxu0
  %v259 = vadd.f32 %v142, %v241
  %v260 = vadd.f32 %v143, %v246
  %v261 = vadd.f32 %v144, %v251
  %v262 = vadd.f32 %v145, %v256
  %263 = vset.pattern.permute.xlu0 1
  %264 = vperm.xlu0 %263, %v18
  %v265 = vpop.permute.xlu0 %264
  %267 = vset.pattern.permute.xlu0 1
  %268 = vperm.xlu0 %267, %v19
  %v269 = vpop.permute.xlu0 %268
  %271 = vset.pattern.permute.xlu0 1
  %272 = vperm.xlu0 %271, %v20
  %v273 = vpop.permute.xlu0 %272
  %275 = vset.pattern.permute.xlu0 1
  %276 = vperm.xlu0 %275, %v21
  %v277 = vpop.permute.xlu0 %276
  %v279 = vadd.f32 %v259, %v265
  %v280 = vadd.f32 %v260, %v269
  %v281 = vadd.f32 %v261, %v273
  %v282 = vadd.f32 %v262, %v277
  %v283 = vtanh.pop %v279
  %v284 = vtanh.pop %v280
  %v285 = vtanh.pop %v281
  %v286 = vtanh.pop %v282
  %v287 = vmul.f32 %v283, %v151
  %v288 = vmul.f32 %v284, %v151
  %v289 = vmul.f32 %v285, %v151
  %v290 = vmul.f32 %v286, %v151
  %v291 = vld [vmem:[%s2 + $0x40] sm:$0xff]
  %v292 = vld [vmem:[%s2 + $0x48] sm:$0xff]
  %v293 = vld [vmem:[%s2 + $0x50] sm:$0xff]
  %v294 = vld [vmem:[%s2 + $0x58] sm:$0xff]
  %v296 = vsel %vm161, %v291, 0
  %v299 = vsel %vm161, %v292, 0
  %v302 = vsel %vm161, %v293, 0
  %v305 = vsel %vm161, %v294, 0
  %307 = vmatprep.subr.mxu0 0.0
  %308 = vmatpush1.msra.mxu0 %v283
  %309 = vmatprep.subr.mxu0 0.0
  %310 = vmatpush1.msra.mxu0 %v284
  %311 = vmatprep.subr.mxu0 0.0
  %312 = vmatpush1.msra.mxu0 %v285
  %313 = vmatprep.subr.mxu0 0.0
  %314 = vmatpush1.msra.mxu0 %v286
  %315 = vmatprep.subr.mxu0 0.0
  %316 = vmatpush1.msra.mxu0 %v287
  %317 = vmatprep.subr.mxu0 0.0
  %318 = vmatpush1.msra.mxu0 %v288
  %319 = vmatprep.subr.mxu0 0.0
  %320 = vmatpush1.msra.mxu0 %v289
  %321 = vmatprep.subr.mxu0 0.0
  %322 = vmatpush1.msra.mxu0 %v290
  %323 = vmatprep.subr.mxu0 0.0
  %324 = vmatpush1.msra.mxu0 0.0
  %325 = vmatprep.subr.mxu0 0.0
  %326 = vmatpush1.msra.mxu0 0.0
  %327 = vmatprep.subr.mxu0 0.0
  %328 = vmatpush1.msra.mxu0 0.0
  %329 = vmatprep.subr.mxu0 0.0
  %330 = vmatpush1.msra.mxu0 0.0
  %331 = vmatprep.subr.mxu0 0.0
  %332 = vmatpush1.msra.mxu0 0.0
  %333 = vmatprep.subr.mxu0 0.0
  %334 = vmatpush1.msra.mxu0 0.0
  %335 = vmatprep.subr.mxu0 0.0
  %336 = vmatpush1.msra.mxu0 0.0
  %337 = vmatprep.subr.mxu0 0.0
  %338 = vmatpush1.msra.mxu0 0.0
  %339 = vmatprep.subr.mxu0 0.0
  %340 = vmatpush1.msra.mxu0 0.0
  %341 = vmatprep.subr.mxu0 0.0
  %342 = vmatpush1.msra.mxu0 0.0
  %343 = vmatprep.subr.mxu0 0.0
  %344 = vmatpush1.msra.mxu0 0.0
  %345 = vmatprep.subr.mxu0 0.0
  %346 = vmatpush1.msra.mxu0 0.0
  %347 = vmatprep.subr.mxu0 0.0
  %348 = vmatpush1.msra.mxu0 0.0
  %349 = vmatprep.subr.mxu0 0.0
  %350 = vmatpush1.msra.mxu0 0.0
  %351 = vmatprep.subr.mxu0 0.0
  %352 = vmatpush1.msra.mxu0 0.0
  %353 = vmatprep.subr.mxu0 0.0
  %354 = vmatpush1.msra.mxu0 0.0
  %355 = vmatprep.subr.mxu0 0.0
  %356 = vmatpush1.msra.mxu0 0.0
  %357 = vmatprep.subr.mxu0 0.0
  %358 = vmatpush1.msra.mxu0 0.0
  %359 = vmatprep.subr.mxu0 0.0
  %360 = vmatpush1.msra.mxu0 0.0
  %361 = vmatprep.subr.mxu0 0.0
  %362 = vmatpush1.msra.mxu0 0.0
  %363 = vmatprep.subr.mxu0 0.0
  %364 = vmatpush1.msra.mxu0 0.0
  %365 = vmatprep.subr.mxu0 0.0
  %366 = vmatpush1.msra.mxu0 0.0
  %367 = vmatprep.subr.mxu0 0.0
  %368 = vmatpush1.msra.mxu0 0.0
  %369 = vmatprep.subr.mxu0 0.0
  %370 = vmatpush1.msra.mxu0 0.0
  %371 = vmatprep.mubr.f32.mxu0 0.0
  %372 = vmatmul.mubr.f32.gmra.mrb[0].mxu0 %v296
  %v373 = vpop.f32.mrb[0].mxu0
  %v374 = vadd.f32 0.0, %v373
  %v375 = vpop.f32.mrb[0].mxu0
  %376 = vmatprep.mubr.f32.mxu0 0.0
  %377 = vmatmul.mubr.f32.gmra.mrb[0].mxu0 %v299
  %v378 = vpop.f32.mrb[0].mxu0
  %v379 = vadd.f32 0.0, %v378
  %v380 = vpop.f32.mrb[0].mxu0
  %381 = vmatprep.mubr.f32.mxu0 0.0
  %382 = vmatmul.mubr.f32.gmra.mrb[0].mxu0 %v302
  %v383 = vpop.f32.mrb[0].mxu0
  %v384 = vadd.f32 0.0, %v383
  %v385 = vpop.f32.mrb[0].mxu0
  %386 = vmatprep.mubr.f32.mxu0 0.0
  %387 = vmatmul.mubr.f32.gmra.mrb[0].mxu0 %v305
  %v388 = vpop.f32.mrb[0].mxu0
  %v389 = vadd.f32 0.0, %v388
  %v390 = vpop.f32.mrb[0].mxu0
  %391 = vdwg.mxu0
  %v392 = vadd.f32 %v142, %v374
  %v393 = vadd.f32 %v143, %v379
  %v394 = vadd.f32 %v144, %v384
  %v395 = vadd.f32 %v145, %v389
  %396 = vset.pattern.permute.xlu0 2
  %397 = vperm.xlu0 %396, %v18
  %v398 = vpop.permute.xlu0 %397
  %400 = vset.pattern.permute.xlu0 2
  %401 = vperm.xlu0 %400, %v19
  %v402 = vpop.permute.xlu0 %401
  %404 = vset.pattern.permute.xlu0 2
  %405 = vperm.xlu0 %404, %v20
  %v406 = vpop.permute.xlu0 %405
  %408 = vset.pattern.permute.xlu0 2
  %409 = vperm.xlu0 %408, %v21
  %v410 = vpop.permute.xlu0 %409
  %v412 = vadd.f32 %v392, %v398
  %v413 = vadd.f32 %v393, %v402
  %v414 = vadd.f32 %v394, %v406
  %v415 = vadd.f32 %v395, %v410
  %v416 = vtanh.pop %v412
  %v417 = vtanh.pop %v413
  %v418 = vtanh.pop %v414
  %v419 = vtanh.pop %v415
  %v420 = vld [vmem:[%s2 + $0x60] sm:$0xff]
  %v421 = vld [vmem:[%s2 + $0x68] sm:$0xff]
  %423 = vset.pattern.permute.xlu0 3
  %424 = vperm.xlu0 %423, %v421
  %v425 = vpop.permute.xlu0 %424
  %vm427 = vcmask 261120
  %v429 = vsel %vm427, %v420, 0
  %431 = vmatprep.subr.mxu0 0.0
  %432 = vmatpush1.msra.mxu0 %v416
  %433 = vmatprep.subr.mxu0 0.0
  %434 = vmatpush1.msra.mxu0 %v417
  %435 = vmatprep.subr.mxu0 0.0
  %436 = vmatpush1.msra.mxu0 %v418
  %437 = vmatprep.subr.mxu0 0.0
  %438 = vmatpush1.msra.mxu0 %v419
  %439 = vmatprep.subr.mxu0 0.0
  %440 = vmatpush1.msra.mxu0 0.0
  %441 = vmatprep.subr.mxu0 0.0
  %442 = vmatpush1.msra.mxu0 0.0
  %443 = vmatprep.subr.mxu0 0.0
  %444 = vmatpush1.msra.mxu0 0.0
  %445 = vmatprep.subr.mxu0 0.0
  %446 = vmatpush1.msra.mxu0 0.0
  %447 = vmatprep.subr.mxu0 0.0
  %448 = vmatpush1.msra.mxu0 0.0
  %449 = vmatprep.subr.mxu0 0.0
  %450 = vmatpush1.msra.mxu0 0.0
  %451 = vmatprep.subr.mxu0 0.0
  %452 = vmatpush1.msra.mxu0 0.0
  %453 = vmatprep.subr.mxu0 0.0
  %454 = vmatpush1.msra.mxu0 0.0
  %455 = vmatprep.subr.mxu0 0.0
  %456 = vmatpush1.msra.mxu0 0.0
  %457 = vmatprep.subr.mxu0 0.0
  %458 = vmatpush1.msra.mxu0 0.0
  %459 = vmatprep.subr.mxu0 0.0
  %460 = vmatpush1.msra.mxu0 0.0
  %461 = vmatprep.subr.mxu0 0.0
  %462 = vmatpush1.msra.mxu0 0.0
  %463 = vmatprep.subr.mxu0 0.0
  %464 = vmatpush1.msra.mxu0 0.0
  %465 = vmatprep.subr.mxu0 0.0
  %466 = vmatpush1.msra.mxu0 0.0
  %467 = vmatprep.subr.mxu0 0.0
  %468 = vmatpush1.msra.mxu0 0.0
  %469 = vmatprep.subr.mxu0 0.0
  %470 = vmatpush1.msra.mxu0 0.0
  %471 = vmatprep.subr.mxu0 0.0
  %472 = vmatpush1.msra.mxu0 0.0
  %473 = vmatprep.subr.mxu0 0.0
  %474 = vmatpush1.msra.mxu0 0.0
  %475 = vmatprep.subr.mxu0 0.0
  %476 = vmatpush1.msra.mxu0 0.0
  %477 = vmatprep.subr.mxu0 0.0
  %478 = vmatpush1.msra.mxu0 0.0
  %479 = vmatprep.subr.mxu0 0.0
  %480 = vmatpush1.msra.mxu0 0.0
  %481 = vmatprep.subr.mxu0 0.0
  %482 = vmatpush1.msra.mxu0 0.0
  %483 = vmatprep.subr.mxu0 0.0
  %484 = vmatpush1.msra.mxu0 0.0
  %485 = vmatprep.subr.mxu0 0.0
  %486 = vmatpush1.msra.mxu0 0.0
  %487 = vmatprep.subr.mxu0 0.0
  %488 = vmatpush1.msra.mxu0 0.0
  %489 = vmatprep.subr.mxu0 0.0
  %490 = vmatpush1.msra.mxu0 0.0
  %491 = vmatprep.subr.mxu0 0.0
  %492 = vmatpush1.msra.mxu0 0.0
  %493 = vmatprep.subr.mxu0 0.0
  %494 = vmatpush1.msra.mxu0 0.0
  %495 = vmatprep.mubr.f32.mxu0 0.0
  %496 = vmatmul.mubr.f32.gmra.mrb[0].mxu0 %v429
  %v497 = vpop.f32.mrb[0].mxu0
  %v498 = vadd.f32 %v425, %v497
  %v499 = vpop.f32.mrb[0].mxu0
  %500 = vdwg.mxu0
  %vm501 = vcmask 1046529
  %v502 = vsel %vm501, %v498, -inf
  %v503 = vrot.slane %v502, 4
  %v504 = vmax.f32 %v502, %v503
  %v505 = vrot.slane %v504, 2
  %v506 = vmax.f32 %v504, %v505
  %v507 = vrot.slane %v506, 1
  %v508 = vmax.f32 %v506, %v507
  %v509 = vsub.f32 %v498, %v508
  %v510 = vmul.f32 %v509, 1.442695
  %v511 = vpow.pop %v510
  %v513 = vrot.slane %v511, 1
  %vm515 = vcmask 1045504
  %v516 = vsel %vm515, %v513, 0.0
  %v517 = vrot.slane %v516, 4
  %v518 = vadd.f32 %v516, %v517
  %v519 = vrot.slane %v518, 2
  %v520 = vadd.f32 %v518, %v519
  %v521 = vrot.slane %v520, 1
  %v522 = vadd.f32 %v520, %v521
  %v523 = vlog2.pop %v522
  %v524 = vmul.f32 %v523, 0.6931472
  %v525 = vadd.f32 %v508, %v524
  %v526 = vlaneseq
  %v527 = vshrl.u32 %v526, 7
  %vm528 = vcmp.ge.s32.totalorder %v527, 1
  %vm529 = vcmp.le.s32.totalorder %v527, 6
  %vm530 = vmand %vm528, %vm529
  %v531 = vsel %vm530, 1, 0
  %v532 = vcvt.s32.f32 %v531
  %533 = vst [vmem:[%s3] sm:$0xff] %v416
  %534 = vst [vmem:[%s3 + $0x8] sm:$0xff] %v417
  %535 = vst [vmem:[%s3 + $0x10] sm:$0xff] %v418
  %536 = vst [vmem:[%s3 + $0x18] sm:$0xff] %v419
  %v537 = vmul.f32 %v525, %v532
  %v538 = vsub.f32 %v498, %v537
  %539 = vst [vmem:[%s3 + $0x20] sm:$0xff] %v538
  // Predicated region
  $region14: #{gcommnet_forward.1} parent=0 // pred_check
    _
  $region15: #{gcommnet_forward.1} parent=0 // pred_check_branch
    %541 = sbr.rel (0) target = $region17
  $region16: #{gcommnet_forward.1} parent=0 // pred_region
    _
  $region17: #{gcommnet_forward.1} parent=0 // pred_fallthru
    _
  // Predicated region
  $region18: #{gcommnet_forward.1} parent=0 // pred_check
    _
  $region19: #{gcommnet_forward.1} parent=0 // pred_check_branch
    %543 = sbr.rel (0) target = $region21
  $region20: #{gcommnet_forward.1} parent=0 // pred_region
    _
  $region21: #{gcommnet_forward.1} parent=0 // pred_fallthru
    _

</llo_original>
